<compile_context>
chip_gen: v7x
topology: tpu7x:2x2x1
jax: 0.10.0
libtpu: 0.0.40
codegen_flags: <defaults>
</compile_context>

<pallas_src>
import functools

import jax
import jax.numpy as jnp
import numpy as np
from jax import lax
from jax.experimental import pallas as pl
from jax.experimental.pallas import tpu as pltpu


# ----------------------------- Pallas kernel ------------------------------- #

def _fused_stem_kernel(p_ref, w_ref, g_ref, b_ref, y_ref,
                       sum_ref, ssq_ref, scale_ref, bias_ref,
                       *, inv_m, eps, c_out, pack):
    """Phase 0: conv matmul + BN batch-stat accumulation.
       Phase 1: conv matmul + folded BN (scale/bias, hoisted) + ReLU."""
    phase = pl.program_id(0)
    tile = pl.program_id(1)

    # Conv as one MXU matmul on the packed im2col tile:
    #   (tm2, pack*Kp) @ (pack*Kp, pack*C_out) -> (tm2, pack*C_out).
    # Recomputed in both phases; K is tiny so this is far cheaper than an HBM
    # round trip of the f32 conv intermediate.
    acc = jnp.dot(p_ref[...], w_ref[...], preferred_element_type=jnp.float32)

    @pl.when(jnp.logical_and(phase == 0, tile == 0))
    def _init():
        sum_ref[...] = jnp.zeros_like(sum_ref)
        ssq_ref[...] = jnp.zeros_like(ssq_ref)

    @pl.when(phase == 0)
    def _stats():
        sum_ref[...] += jnp.sum(acc, axis=0, keepdims=True)
        ssq_ref[...] += jnp.sum(acc * acc, axis=0, keepdims=True)

    # Hoisted BN folding: run ONCE at the first phase-1 tile, cache the folded
    # per-lane scale/bias in VMEM scratch and reuse for every later tile.
    @pl.when(jnp.logical_and(phase == 1, tile == 0))
    def _fold_bn():
        s = sum_ref[...]
        q = ssq_ref[...]
        # Fold the `pack` lane slots so every lane holds its channel's total.
        # (shifts are multiples of c_out covering the full cycle, so the fold
        #  is direction-agnostic).  XLU roll -> nearly free, and done once.
        tot_s = s
        tot_q = q
        for j in range(1, pack):
            tot_s = tot_s + pltpu.roll(s, shift=j * c_out, axis=1)
            tot_q = tot_q + pltpu.roll(q, shift=j * c_out, axis=1)
        mean = tot_s * inv_m
        var = jnp.maximum(tot_q * inv_m - mean * mean, 0.0)    # biased var >= 0
        scale = g_ref[...] * lax.rsqrt(var + eps)
        scale_ref[...] = scale
        bias_ref[...] = b_ref[...] - mean * scale

    @pl.when(phase == 1)
    def _bn_relu():
        y_ref[...] = jnp.maximum(acc * scale_ref[...] + bias_ref[...], 0.0)


# ------------------------------ host helpers ------------------------------- #

def _im2col(x_nhwc, ksize, stride, pad):
    """(N, H, W, C_in) -> (N*Ho*Wo, ksize*ksize*C_in), K order (kh, kw, c_in)."""
    n, h, w, c_in = x_nhwc.shape
    ho = (h + 2 * pad - ksize) // stride + 1
    wo = (w + 2 * pad - ksize) // stride + 1
    x_pad = jnp.pad(x_nhwc, ((0, 0), (pad, pad), (pad, pad), (0, 0)))
    cols = []
    for kh in range(ksize):
        for kw in range(ksize):
            sl = x_pad[:, kh:kh + stride * (ho - 1) + 1:stride,
                          kw:kw + stride * (wo - 1) + 1:stride, :]
            cols.append(sl)                                    # (N, Ho, Wo, C_in)
    patches = jnp.stack(cols, axis=3)                          # (N, Ho, Wo, 9, C_in)
    return patches.reshape(n * ho * wo, ksize * ksize * c_in), ho, wo


def _vmem_capacity_bytes():
    """Best-effort per-chip VMEM capacity; conservative (v7x-sized) fallback."""
    try:
        info = pltpu.get_tpu_info()
        for attr in ("vmem_capacity_bytes", "vmem_bytes", "vmem_size_bytes"):
            v = getattr(info, attr, None)
            if v:
                return int(v)
    except Exception:
        pass
    return 64 * 1024 * 1024


def _choose_pack(kp, c_out):
    """Smallest pack (<=8) making LHS (pack*kp) and output (pack*c_out) lane
    widths multiples of 128; fall back to 'fill 128 output lanes', then 1."""
    for p in range(1, 9):
        if (p * kp) % 128 == 0 and (p * c_out) % 128 == 0:
            return p
    if c_out <= 128 and 128 % c_out == 0:
        return 128 // c_out
    return 1


# ------------------------------ host wrapper ------------------------------- #

@functools.partial(jax.jit, static_argnames=("ksize", "stride", "eps", "tm",
                                             "compute_dtype", "out_layout"))
def hiaml_stem_forward(x_nchw, conv_w, gamma, beta, *, ksize=3, stride=2,
                       eps=1e-5, tm=None, compute_dtype=jnp.float32,
                       out_layout="NCHW"):
    """HiAMLStem forward (BatchNorm in training mode => batch statistics).

    x_nchw : (N, C_in, H, W) f32, conv_w : (C_out, C_in, k, k) f32,
    gamma/beta : (C_out,) f32  ->  (N, C_out, Ho, Wo) f32 (or NHWC).
    `tm` optionally caps the (unpacked) M-tile; default = VMEM-derived max."""
    n, c_in, h, w = x_nchw.shape
    c_out = conv_w.shape[0]
    pad = ksize // 2

    x_nhwc = jnp.transpose(x_nchw, (0, 2, 3, 1))
    patches, ho, wo = _im2col(x_nhwc, ksize, stride, pad)       # (M, K)
    m, k = patches.shape

    # Pad K up to a multiple of 8 for a clean sublane layout (27 -> 32).
    kp = ((k + 7) // 8) * 8
    patches = jnp.pad(patches, ((0, 0), (0, kp - k)))

    # Lane packing: `pack` consecutive output rows side by side so both the
    # LHS (pack*kp) and output (pack*c_out) are 128-lane dense.
    pack = _choose_pack(kp, c_out)
    lanes = pack * c_out

    # --- tile sizing from per-chip VMEM budget ------------------------------
    lhs_item = jnp.dtype(compute_dtype).itemsize
    vmem_cap = _vmem_capacity_bytes()
    vmem_limit = min(int(vmem_cap * 3 // 4), 100 * 1024 * 1024)  # 48MiB v7x / 96MiB v5e,v6e
    tile_budget = int(vmem_limit * 0.6)                          # headroom for compiler
    per_packed_row = 2 * pack * kp * lhs_item + 2 * lanes * 4    # dbl-buffered LHS + out
    const_bytes = 2 * (pack * kp) * lanes * lhs_item + 16 * lanes * 4
    max_tm2 = max(8, (tile_budget - const_bytes) // per_packed_row)
    max_tm2 = int(max_tm2 // 8) * 8

    # Row tile quantized so the packed block keeps (8, 128)-friendly tiling.
    # Zero-padded rows add 0 to sum/ssq (true M is the divisor), so BN stats
    # stay exact, and the pad rows are sliced off afterwards.
    row_quant = 8 * pack
    m_cover = ((m + row_quant - 1) // row_quant) * row_quant
    tm_rows = min(max_tm2 * pack, m_cover)
    if tm is not None:
        tm_rows = min(tm_rows, max(row_quant, (int(tm) // row_quant) * row_quant))
    tm_rows = max(row_quant, (tm_rows // row_quant) * row_quant)
    mp = ((m + tm_rows - 1) // tm_rows) * tm_rows
    patches = jnp.pad(patches, ((0, mp - m), (0, 0)))

    m2 = mp // pack
    tm2 = tm_rows // pack
    nt = m2 // tm2
    packed = patches.reshape(m2, pack * kp).astype(compute_dtype)

    # Block-diagonal weight so one matmul yields the packed (…, lanes) layout.
    w_flat = jnp.transpose(conv_w, (2, 3, 1, 0)).reshape(k, c_out)
    w_flat = jnp.pad(w_flat, ((0, kp - k), (0, 0))).astype(jnp.float32)
    w_big = jnp.zeros((pack * kp, lanes), jnp.float32)
    for j in range(pack):
        w_big = w_big.at[j * kp:(j + 1) * kp,
                         j * c_out:(j + 1) * c_out].set(w_flat)
    w_big = w_big.astype(compute_dtype)

    gamma2 = jnp.tile(gamma.reshape(1, c_out).astype(jnp.float32), (1, pack))
    beta2 = jnp.tile(beta.reshape(1, c_out).astype(jnp.float32), (1, pack))

    kernel = functools.partial(_fused_stem_kernel, inv_m=1.0 / m, eps=eps,
                               c_out=c_out, pack=pack)

    y = pl.pallas_call(
        kernel,
        out_shape=jax.ShapeDtypeStruct((m2, lanes), jnp.float32),
        grid=(2, nt),                                    # (phase, M-tile)
        in_specs=[
            pl.BlockSpec((tm2, pack * kp), lambda p, i: (i, 0)),
            pl.BlockSpec((pack * kp, lanes), lambda p, i: (0, 0)),
            pl.BlockSpec((1, lanes), lambda p, i: (0, 0)),
            pl.BlockSpec((1, lanes), lambda p, i: (0, 0)),
        ],
        # `p * i` parks the output window on block 0 during the stats phase
        # (no HBM write-back), then streams blocks out during phase 1.
        out_specs=pl.BlockSpec((tm2, lanes), lambda p, i: (p * i, 0)),
        scratch_shapes=[pltpu.VMEM((1, lanes), jnp.float32),   # per-lane sum
                        pltpu.VMEM((1, lanes), jnp.float32),   # per-lane sumsq
                        pltpu.VMEM((1, lanes), jnp.float32),   # folded BN scale
                        pltpu.VMEM((1, lanes), jnp.float32)],  # folded BN bias
        compiler_params=pltpu.CompilerParams(
            dimension_semantics=("arbitrary", "arbitrary"),
            vmem_limit_bytes=int(vmem_limit)),
    )(packed, w_big, gamma2, beta2)

    y = y.reshape(mp, c_out)[:m]                         # unpack lanes, drop pad
    y = y.reshape(n, ho, wo, c_out)
    if out_layout == "NHWC":
        return y
    # TODO(synk): fold this transpose into the consumer when it accepts NHWC.
    return jnp.transpose(y, (0, 3, 1, 2))                # back to NCHW


# ------------------------------- reference --------------------------------- #

def hiaml_stem_reference(x_nchw, conv_w, gamma, beta, *, stride=2, eps=1e-5):
    pad = conv_w.shape[-1] // 2
    y = lax.conv_general_dilated(
        x_nchw, conv_w, window_strides=(stride, stride),
        padding=((pad, pad), (pad, pad)),
        dimension_numbers=("NCHW", "OIHW", "NCHW"))
    mean = jnp.mean(y, axis=(0, 2, 3), keepdims=True)
    var = jnp.mean((y - mean) ** 2, axis=(0, 2, 3), keepdims=True)  # biased
    y = (y - mean) * lax.rsqrt(var + eps)
    y = y * gamma.reshape(1, -1, 1, 1) + beta.reshape(1, -1, 1, 1)
    return jnp.maximum(y, 0.0)


# --------------------------------- main ------------------------------------ #

if __name__ == "__main__":
    key = jax.random.PRNGKey(0)
    k_x, k_w, k_g, k_b = jax.random.split(key, 4)

    N, C_IN, H, W = 2, 3, 16, 16
    C_OUT, KSIZE, STRIDE = 64, 3, 2

    x = jax.random.normal(k_x, (N, C_IN, H, W), dtype=jnp.float32)
    conv_w = jax.random.normal(k_w, (C_OUT, C_IN, KSIZE, KSIZE),
                               dtype=jnp.float32) * 0.1
    gamma = 1.0 + 0.1 * jax.random.normal(k_g, (C_OUT,), dtype=jnp.float32)
    beta = 0.1 * jax.random.normal(k_b, (C_OUT,), dtype=jnp.float32)

    out = hiaml_stem_forward(x, conv_w, gamma, beta,
                             ksize=KSIZE, stride=STRIDE)
    out = jax.block_until_ready(out)

    ref = hiaml_stem_reference(x, conv_w, gamma, beta, stride=STRIDE)
    np.testing.assert_allclose(np.asarray(out), np.asarray(ref),
                               rtol=1e-4, atol=1e-4)

    print("KERNEL_OK")
</pallas_src>

<mosaic_0001>
module attributes {stable_mosaic.version = 11 : i64} {
  func.func @_fused_stem_kernel(%arg0: i32, %arg1: i32, %arg2: memref<32x128xf32, #tpu.memory_space<vmem>>, %arg3: memref<128x256xf32, #tpu.memory_space<vmem>>, %arg4: memref<1x256xf32, #tpu.memory_space<vmem>>, %arg5: memref<1x256xf32, #tpu.memory_space<vmem>>, %arg6: memref<32x256xf32, #tpu.memory_space<vmem>>, %arg7: memref<1x256xf32, #tpu.memory_space<vmem>>, %arg8: memref<1x256xf32, #tpu.memory_space<vmem>>, %arg9: memref<1x256xf32, #tpu.memory_space<vmem>>, %arg10: memref<1x256xf32, #tpu.memory_space<vmem>>) attributes {dimension_semantics = [#tpu.dimension_semantics<arbitrary>, #tpu.dimension_semantics<arbitrary>], iteration_bounds = array<i64: 2, 1>, scalar_prefetch = 0 : i64, scratch_operands = 4 : i64, tpu.core_type = #tpu.core_type<tc>, window_params = [{transform_indices = @transform_0, window_bounds = array<i64: 32, 128>}, {pipeline_mode = #tpu.pipeline_mode<synchronous>, transform_indices = @transform_1, window_bounds = array<i64: 128, 256>}, {pipeline_mode = #tpu.pipeline_mode<synchronous>, transform_indices = @transform_2, window_bounds = array<i64: 1, 256>}, {pipeline_mode = #tpu.pipeline_mode<synchronous>, transform_indices = @transform_3, window_bounds = array<i64: 1, 256>}, {transform_indices = @transform_4, window_bounds = array<i64: 32, 256>}]} {
    %c0 = arith.constant 0 : index
    %c0_0 = arith.constant 0 : index
    %0 = vector.load %arg2[%c0, %c0_0] : memref<32x128xf32, #tpu.memory_space<vmem>>, vector<32x128xf32>
    %c0_1 = arith.constant 0 : index
    %c0_2 = arith.constant 0 : index
    %1 = vector.load %arg3[%c0_1, %c0_2] : memref<128x256xf32, #tpu.memory_space<vmem>>, vector<128x256xf32>
    %cst = arith.constant dense<0.000000e+00> : vector<32x256xf32>
    %2 = tpu.matmul %0, %1, %cst {dimension_numbers = #tpu.dot_dimension_numbers<[1], [0], [0], [1], [0, 0, 1, 1], [], []>} : vector<32x128xf32>, vector<128x256xf32>, vector<32x256xf32> -> vector<32x256xf32>
    %c0_i32 = arith.constant 0 : i32
    %3 = arith.cmpi eq, %arg0, %c0_i32 : i32
    %c0_i32_3 = arith.constant 0 : i32
    %4 = arith.cmpi eq, %arg1, %c0_i32_3 : i32
    %5 = arith.andi %3, %4 : i1
    %6 = arith.extui %5 : i1 to i32
    %c0_i32_4 = arith.constant 0 : i32
    %7 = arith.cmpi ne, %6, %c0_i32_4 : i32
    scf.if %7 {
      %cst_11 = arith.constant 0.000000e+00 : f32
      %19 = vector.broadcast %cst_11 : f32 to vector<1x256xf32>
      %c0_12 = arith.constant 0 : index
      %c0_13 = arith.constant 0 : index
      %20 = vector.load %arg7[%c0_12, %c0_13] : memref<1x256xf32, #tpu.memory_space<vmem>>, vector<1x256xf32>
      tpu.vector_store %arg7[%c0_12, %c0_13], %19 {strides = array<i32>} : memref<1x256xf32, #tpu.memory_space<vmem>>, vector<1x256xf32>,
      %cst_14 = arith.constant 0.000000e+00 : f32
      %21 = vector.broadcast %cst_14 : f32 to vector<1x256xf32>
      %c0_15 = arith.constant 0 : index
      %c0_16 = arith.constant 0 : index
      %22 = vector.load %arg8[%c0_15, %c0_16] : memref<1x256xf32, #tpu.memory_space<vmem>>, vector<1x256xf32>
      tpu.vector_store %arg8[%c0_15, %c0_16], %21 {strides = array<i32>} : memref<1x256xf32, #tpu.memory_space<vmem>>, vector<1x256xf32>,
    } else {
    }
    %c0_i32_5 = arith.constant 0 : i32
    %8 = arith.cmpi eq, %arg0, %c0_i32_5 : i32
    %9 = arith.extui %8 : i1 to i32
    %c0_i32_6 = arith.constant 0 : i32
    %10 = arith.cmpi ne, %9, %c0_i32_6 : i32
    scf.if %10 {
      %c0_11 = arith.constant 0 : index
      %c0_12 = arith.constant 0 : index
      %19 = vector.load %arg7[%c0_11, %c0_12] : memref<1x256xf32, #tpu.memory_space<vmem>>, vector<1x256xf32>
      %cst_13 = arith.constant dense<0.000000e+00> : vector<256xf32>
      %20 = vector.multi_reduction <add>, %2, %cst_13 [0] : vector<32x256xf32> to vector<256xf32>
      %21 = vector.shape_cast %20 : vector<256xf32> to vector<1x256xf32>
      %22 = arith.addf %19, %21 : vector<1x256xf32>
      %c0_14 = arith.constant 0 : index
      %c0_15 = arith.constant 0 : index
      %23 = vector.load %arg7[%c0_14, %c0_15] : memref<1x256xf32, #tpu.memory_space<vmem>>, vector<1x256xf32>
      tpu.vector_store %arg7[%c0_14, %c0_15], %22 {strides = array<i32>} : memref<1x256xf32, #tpu.memory_space<vmem>>, vector<1x256xf32>,
      %c0_16 = arith.constant 0 : index
      %c0_17 = arith.constant 0 : index
      %24 = vector.load %arg8[%c0_16, %c0_17] : memref<1x256xf32, #tpu.memory_space<vmem>>, vector<1x256xf32>
      %25 = arith.mulf %2, %2 : vector<32x256xf32>
      %cst_18 = arith.constant dense<0.000000e+00> : vector<256xf32>
      %26 = vector.multi_reduction <add>, %25, %cst_18 [0] : vector<32x256xf32> to vector<256xf32>
      %27 = vector.shape_cast %26 : vector<256xf32> to vector<1x256xf32>
      %28 = arith.addf %24, %27 : vector<1x256xf32>
      %c0_19 = arith.constant 0 : index
      %c0_20 = arith.constant 0 : index
      %29 = vector.load %arg8[%c0_19, %c0_20] : memref<1x256xf32, #tpu.memory_space<vmem>>, vector<1x256xf32>
      tpu.vector_store %arg8[%c0_19, %c0_20], %28 {strides = array<i32>} : memref<1x256xf32, #tpu.memory_space<vmem>>, vector<1x256xf32>,
    } else {
    }
    %c1_i32 = arith.constant 1 : i32
    %11 = arith.cmpi eq, %arg0, %c1_i32 : i32
    %c0_i32_7 = arith.constant 0 : i32
    %12 = arith.cmpi eq, %arg1, %c0_i32_7 : i32
    %13 = arith.andi %11, %12 : i1
    %14 = arith.extui %13 : i1 to i32
    %c0_i32_8 = arith.constant 0 : i32
    %15 = arith.cmpi ne, %14, %c0_i32_8 : i32
    scf.if %15 {
      %c0_11 = arith.constant 0 : index
      %c0_12 = arith.constant 0 : index
      %19 = vector.load %arg7[%c0_11, %c0_12] : memref<1x256xf32, #tpu.memory_space<vmem>>, vector<1x256xf32>
      %c0_13 = arith.constant 0 : index
      %c0_14 = arith.constant 0 : index
      %20 = vector.load %arg8[%c0_13, %c0_14] : memref<1x256xf32, #tpu.memory_space<vmem>>, vector<1x256xf32>
      %c64_i32 = arith.constant 64 : i32
      %21 = tpu.dynamic_rotate %19 by %c64_i32 dim 1 : vector<1x256xf32>, i32 -> vector<1x256xf32>
      %22 = arith.addf %19, %21 : vector<1x256xf32>
      %c64_i32_15 = arith.constant 64 : i32
      %23 = tpu.dynamic_rotate %20 by %c64_i32_15 dim 1 : vector<1x256xf32>, i32 -> vector<1x256xf32>
      %24 = arith.addf %20, %23 : vector<1x256xf32>
      %c128_i32 = arith.constant 128 : i32
      %25 = tpu.dynamic_rotate %19 by %c128_i32 dim 1 : vector<1x256xf32>, i32 -> vector<1x256xf32>
      %26 = arith.addf %22, %25 : vector<1x256xf32>
      %c128_i32_16 = arith.constant 128 : i32
      %27 = tpu.dynamic_rotate %20 by %c128_i32_16 dim 1 : vector<1x256xf32>, i32 -> vector<1x256xf32>
      %28 = arith.addf %24, %27 : vector<1x256xf32>
      %c192_i32 = arith.constant 192 : i32
      %29 = tpu.dynamic_rotate %19 by %c192_i32 dim 1 : vector<1x256xf32>, i32 -> vector<1x256xf32>
      %30 = arith.addf %26, %29 : vector<1x256xf32>
      %c192_i32_17 = arith.constant 192 : i32
      %31 = tpu.dynamic_rotate %20 by %c192_i32_17 dim 1 : vector<1x256xf32>, i32 -> vector<1x256xf32>
      %32 = arith.addf %28, %31 : vector<1x256xf32>
      %cst_18 = arith.constant 7.812500e-03 : f32
      %33 = vector.broadcast %cst_18 : f32 to vector<1x256xf32>
      %34 = arith.mulf %30, %33 : vector<1x256xf32>
      %cst_19 = arith.constant 7.812500e-03 : f32
      %35 = vector.broadcast %cst_19 : f32 to vector<1x256xf32>
      %36 = arith.mulf %32, %35 : vector<1x256xf32>
      %37 = arith.mulf %34, %34 : vector<1x256xf32>
      %38 = arith.subf %36, %37 : vector<1x256xf32>
      %cst_20 = arith.constant 0.000000e+00 : f32
      %39 = vector.broadcast %cst_20 : f32 to vector<1x256xf32>
      %40 = arith.maximumf %38, %39 : vector<1x256xf32>
      %c0_21 = arith.constant 0 : index
      %c0_22 = arith.constant 0 : index
      %41 = vector.load %arg4[%c0_21, %c0_22] : memref<1x256xf32, #tpu.memory_space<vmem>>, vector<1x256xf32>
      %cst_23 = arith.constant 9.99999974E-6 : f32
      %42 = vector.broadcast %cst_23 : f32 to vector<1x256xf32>
      %43 = arith.addf %40, %42 : vector<1x256xf32>
      %44 = math.rsqrt %43 : vector<1x256xf32>
      %45 = arith.mulf %41, %44 : vector<1x256xf32>
      %c0_24 = arith.constant 0 : index
      %c0_25 = arith.constant 0 : index
      %46 = vector.load %arg9[%c0_24, %c0_25] : memref<1x256xf32, #tpu.memory_space<vmem>>, vector<1x256xf32>
      tpu.vector_store %arg9[%c0_24, %c0_25], %45 {strides = array<i32>} : memref<1x256xf32, #tpu.memory_space<vmem>>, vector<1x256xf32>,
      %c0_26 = arith.constant 0 : index
      %c0_27 = arith.constant 0 : index
      %47 = vector.load %arg5[%c0_26, %c0_27] : memref<1x256xf32, #tpu.memory_space<vmem>>, vector<1x256xf32>
      %48 = arith.mulf %34, %45 : vector<1x256xf32>
      %49 = arith.subf %47, %48 : vector<1x256xf32>
      %c0_28 = arith.constant 0 : index
      %c0_29 = arith.constant 0 : index
      %50 = vector.load %arg10[%c0_28, %c0_29] : memref<1x256xf32, #tpu.memory_space<vmem>>, vector<1x256xf32>
      tpu.vector_store %arg10[%c0_28, %c0_29], %49 {strides = array<i32>} : memref<1x256xf32, #tpu.memory_space<vmem>>, vector<1x256xf32>,
    } else {
    }
    %c1_i32_9 = arith.constant 1 : i32
    %16 = arith.cmpi eq, %arg0, %c1_i32_9 : i32
    %17 = arith.extui %16 : i1 to i32
    %c0_i32_10 = arith.constant 0 : i32
    %18 = arith.cmpi ne, %17, %c0_i32_10 : i32
    scf.if %18 {
      %c0_11 = arith.constant 0 : index
      %c0_12 = arith.constant 0 : index
      %19 = vector.load %arg9[%c0_11, %c0_12] : memref<1x256xf32, #tpu.memory_space<vmem>>, vector<1x256xf32>
      %20 = vector.broadcast %19 : vector<1x256xf32> to vector<32x256xf32>
      %21 = arith.mulf %2, %20 : vector<32x256xf32>
      %c0_13 = arith.constant 0 : index
      %c0_14 = arith.constant 0 : index
      %22 = vector.load %arg10[%c0_13, %c0_14] : memref<1x256xf32, #tpu.memory_space<vmem>>, vector<1x256xf32>
      %23 = vector.broadcast %22 : vector<1x256xf32> to vector<32x256xf32>
      %24 = arith.addf %21, %23 : vector<32x256xf32>
      %cst_15 = arith.constant 0.000000e+00 : f32
      %25 = vector.broadcast %cst_15 : f32 to vector<32x256xf32>
      %26 = arith.maximumf %24, %25 : vector<32x256xf32>
      %c0_16 = arith.constant 0 : index
      %c0_17 = arith.constant 0 : index
      %27 = vector.load %arg6[%c0_16, %c0_17] : memref<32x256xf32, #tpu.memory_space<vmem>>, vector<32x256xf32>
      tpu.vector_store %arg6[%c0_16, %c0_17], %26 {strides = array<i32>} : memref<32x256xf32, #tpu.memory_space<vmem>>, vector<32x256xf32>,
    } else {
    }
    return
  }
  func.func @transform_0(%arg0: i32, %arg1: i32) -> (i32, i32) {
    %c0_i32 = arith.constant 0 : i32
    %c0_i32_0 = arith.constant 0 : i32
    return %arg1, %c0_i32 : i32, i32
  }
  func.func @transform_1(%arg0: i32, %arg1: i32) -> (i32, i32) {
    %c0_i32 = arith.constant 0 : i32
    %c0_i32_0 = arith.constant 0 : i32
    %c0_i32_1 = arith.constant 0 : i32
    return %c0_i32, %c0_i32_0 : i32, i32
  }
  func.func @transform_2(%arg0: i32, %arg1: i32) -> (i32, i32) {
    %c0_i32 = arith.constant 0 : i32
    %c0_i32_0 = arith.constant 0 : i32
    %c0_i32_1 = arith.constant 0 : i32
    return %c0_i32, %c0_i32_0 : i32, i32
  }
  func.func @transform_3(%arg0: i32, %arg1: i32) -> (i32, i32) {
    %c0_i32 = arith.constant 0 : i32
    %c0_i32_0 = arith.constant 0 : i32
    %c0_i32_1 = arith.constant 0 : i32
    return %c0_i32, %c0_i32_0 : i32, i32
  }
  func.func @transform_4(%arg0: i32, %arg1: i32) -> (i32, i32) {
    %0 = arith.muli %arg0, %arg1 : i32
    %c0_i32 = arith.constant 0 : i32
    %c0_i32_0 = arith.constant 0 : i32
    return %0, %c0_i32 : i32, i32
  }
}

</mosaic_0001>

<llo_original>
// kernel: hiaml_stem_forward.1
$region0: #{hiaml_stem_forward.1}
  #allocation0 [shape = 'u32[]', space=smem, size = 0x4, offset = 0x4, fixed_abs, tag = 'smem constant byte address 0x4 - core index']
  #allocation1 [shape = 'u32[144,128]{1,0:T(1,128)}', space=vmem, size = 0x12000, scoped, tag = 'internal scratch']
  #allocation2 [shape = 'f32[1,256]{1,0:T(1,128)}', space=vmem, size = 0x400, scoped, tag = 'scratch operand']
  #allocation3 [shape = 'f32[1,256]{1,0:T(1,128)}', space=vmem, size = 0x400, scoped, tag = 'scratch operand']
  #allocation4 [shape = 'f32[1,256]{1,0:T(1,128)}', space=vmem, size = 0x400, scoped, tag = 'scratch operand']
  #allocation5 [shape = 'f32[1,256]{1,0:T(1,128)}', space=vmem, size = 0x400, scoped, tag = 'scratch operand']
  %s0 = inlined_call_operand.vmem [shape: f32[32,128], index: 0, kind: input, shape index: {}]
  %s1 = inlined_call_operand.vmem [shape: f32[128,256], index: 1, kind: input, shape index: {}]
  %s2 = inlined_call_operand.vmem [shape: f32[1,256], index: 2, kind: input, shape index: {}]
  %s3 = inlined_call_operand.vmem [shape: f32[1,256], index: 3, kind: input, shape index: {}]
  %s4 = inlined_call_operand.vmem [shape: f32[32,256], index: 4, kind: output, shape index: {}]
  %s5 = sld [smem:[#allocation0]]
  $region65: #{hiaml_stem_forward.1} parent=0
    _
  %s7 = ssub.s32 1, %s5
  %s8 = scalar_select 0, %s7, %s5
  loop: start=0, step=1, limit=4
  $region2: #{hiaml_stem_forward.1} parent=0 // loop_pre_header
    _
  $region3: #{hiaml_stem_forward.1} parent=0 // loop_header
    %s10 = sphi 0, %s14
    %p11 = scmp.ge.s32.totalorder %s10, 4
    %s17 = sphi 0, %s29
    %s18 = sphi 0, %s25
    %s19 = sphi 0, %s17
    %s20 = sphi 0, %s18
    %s21 = sphi 0, %s19
    %s22 = sphi 0, %s20
    %s32 = sphi 0, %s34
    %s35 = sphi 0, %s32
    %s36 = sphi 0, %s35
    %s52 = sphi 0, %s36
    %s56 = sphi 0, %s56
    %s58 = sphi 0, %s56
    %s59 = sphi 0, %s58
    %s73 = sphi 0, %s59
    %s77 = sphi 0, %s77
    %s79 = sphi 0, %s77
    %s80 = sphi 0, %s79
    %s94 = sphi 0, %s80
    %s98 = sphi 0, %s98
    %s100 = sphi 0, %s98
    %s101 = sphi 0, %s100
    %s115 = sphi 0, %s101
    %s123 = sphi 0, %s125
    %s126 = sphi 0, %s123
    %s127 = sphi 0, %s126
    %s143 = sphi 0, %s127
  $region4: #{hiaml_stem_forward.1} parent=0 // loop_header_branch
    %13 = sbr.rel (%p11) target = $region8
  $region5: #{hiaml_stem_forward.1} parent=0 // loop_body
    %s15 = ssub.s32 %s10, 1
    %s16 = ssub.s32 %s10, 2
    %s23 = sadd.s32 1, %s18
    %p24 = scmp.ge.s32.totalorder %s23, 1
    %s25 = scalar_select %p24, 0, %s23
    %s26 = sadd.s32 1, %s17
    %s27 = scalar_select %p24, %s26, %s17
    %p28 = scmp.ge.s32.totalorder %s27, 2
    %s29 = scalar_select %p28, 0, %s27
    %s30 = ssub.s32 %s18, %s25
    %p31 = scmp.eq.s32.totalorder %s30, 0
    %s33 = sadd.s32 %s32, 1
    %s34 = scalar_select %p31, %s32, %s33
    %p37 = pneg %p31
    %p38 = scmp.eq.s32.totalorder %s10, 1
    %p39 = por %p37, %p38
    %p40 = scmp.ne.s32.totalorder %s32, %s35
    %p41 = scmp.eq.s32.totalorder %s10, 0
    %p42 = por %p40, %p41
    %p43 = scmp.ne.s32.totalorder %s32, %s35
    %p44 = scmp.eq.s32.totalorder %s15, 1
    %p45 = por %p43, %p44
    %p46 = scmp.ne.s32.totalorder %s35, %s36
    %p47 = scmp.eq.s32.totalorder %s15, 0
    %p48 = por %p46, %p47
    %p49 = scmp.ne.s32.totalorder %s35, %s36
    %p50 = scmp.eq.s32.totalorder %s16, 1
    %p51 = por %p49, %p50
    %p53 = scmp.ne.s32.totalorder %s36, %s52
    %p54 = scmp.eq.s32.totalorder %s16, 0
    %p55 = por %p53, %p54
    %s57 = sadd.s32 %s56, 1
    %p60 = scmp.eq.s32.totalorder %s10, 1
    %p61 = scmp.ne.s32.totalorder %s56, %s58
    %p62 = scmp.eq.s32.totalorder %s10, 0
    %p63 = por %p61, %p62
    %p64 = scmp.ne.s32.totalorder %s56, %s58
    %p65 = scmp.eq.s32.totalorder %s15, 1
    %p66 = por %p64, %p65
    %p67 = scmp.ne.s32.totalorder %s58, %s59
    %p68 = scmp.eq.s32.totalorder %s15, 0
    %p69 = por %p67, %p68
    %p70 = scmp.ne.s32.totalorder %s58, %s59
    %p71 = scmp.eq.s32.totalorder %s16, 1
    %p72 = por %p70, %p71
    %p74 = scmp.ne.s32.totalorder %s59, %s73
    %p75 = scmp.eq.s32.totalorder %s16, 0
    %p76 = por %p74, %p75
    %s78 = sadd.s32 %s77, 1
    %p81 = scmp.eq.s32.totalorder %s10, 1
    %p82 = scmp.ne.s32.totalorder %s77, %s79
    %p83 = scmp.eq.s32.totalorder %s10, 0
    %p84 = por %p82, %p83
    %p85 = scmp.ne.s32.totalorder %s77, %s79
    %p86 = scmp.eq.s32.totalorder %s15, 1
    %p87 = por %p85, %p86
    %p88 = scmp.ne.s32.totalorder %s79, %s80
    %p89 = scmp.eq.s32.totalorder %s15, 0
    %p90 = por %p88, %p89
    %p91 = scmp.ne.s32.totalorder %s79, %s80
    %p92 = scmp.eq.s32.totalorder %s16, 1
    %p93 = por %p91, %p92
    %p95 = scmp.ne.s32.totalorder %s80, %s94
    %p96 = scmp.eq.s32.totalorder %s16, 0
    %p97 = por %p95, %p96
    %s99 = sadd.s32 %s98, 1
    %p102 = scmp.eq.s32.totalorder %s10, 1
    %p103 = scmp.ne.s32.totalorder %s98, %s100
    %p104 = scmp.eq.s32.totalorder %s10, 0
    %p105 = por %p103, %p104
    %p106 = scmp.ne.s32.totalorder %s98, %s100
    %p107 = scmp.eq.s32.totalorder %s15, 1
    %p108 = por %p106, %p107
    %p109 = scmp.ne.s32.totalorder %s100, %s101
    %p110 = scmp.eq.s32.totalorder %s15, 0
    %p111 = por %p109, %p110
    %p112 = scmp.ne.s32.totalorder %s100, %s101
    %p113 = scmp.eq.s32.totalorder %s16, 1
    %p114 = por %p112, %p113
    %p116 = scmp.ne.s32.totalorder %s101, %s115
    %p117 = scmp.eq.s32.totalorder %s16, 0
    %p118 = por %p116, %p117
    %s119 = smul.u32 %s17, %s18
    %s120 = smul.u32 %s29, %s25
    %s121 = ssub.s32 %s119, %s120
    %p122 = scmp.eq.s32.totalorder %s121, 0
    %s124 = sadd.s32 %s123, 1
    %s125 = scalar_select %p122, %s123, %s124
    %p128 = pneg %p122
    %p129 = scmp.eq.s32.totalorder %s10, 1
    %p130 = por %p128, %p129
    %p131 = scmp.ne.s32.totalorder %s123, %s126
    %p132 = scmp.eq.s32.totalorder %s10, 0
    %p133 = por %p131, %p132
    %p134 = scmp.ne.s32.totalorder %s123, %s126
    %p135 = scmp.eq.s32.totalorder %s15, 1
    %p136 = por %p134, %p135
    %p137 = scmp.ne.s32.totalorder %s126, %s127
    %p138 = scmp.eq.s32.totalorder %s15, 0
    %p139 = por %p137, %p138
    %p140 = scmp.ne.s32.totalorder %s126, %s127
    %p141 = scmp.eq.s32.totalorder %s16, 1
    %p142 = por %p140, %p141
    %p144 = scmp.ne.s32.totalorder %s127, %s143
    %p145 = scmp.eq.s32.totalorder %s16, 0
    %p146 = por %p144, %p145
    %p147 = scmp.le.s32.totalorder 1, %s10
    %p148 = scmp.lt.s32.totalorder %s10, 3
    %p149 = pnand %p147, %p148
    %p150 = pneg %p149
    // Predicated region
    $region9: #{hiaml_stem_forward.1} parent=5 // pred_check
      _
    $region10: #{hiaml_stem_forward.1} parent=5 // pred_check_branch
      %152 = sbr.rel (%p149) target = $region12
    $region11: #{hiaml_stem_forward.1} parent=5 // pred_region
      %s153 = ssub.s32 %s10, 1
      // Predicated region
      $region13: #{hiaml_stem_forward.1} parent=11 // pred_check
        %p154 = pneg %p48
      $region14: #{hiaml_stem_forward.1} parent=11 // pred_check_branch
        %156 = sbr.rel (%p154) target = $region16
      $region15: #{hiaml_stem_forward.1} parent=11 // pred_region
        %s157 = smul.u32 4, %s20
        %p158 = scmp.lt.s32.totalorder %s157, 3
        %s159 = scalar_select %p158, %s157, 3
        %s160 = smul.addr %s159, 8
        %s161 = scalar_lea.vmem %s0, %s160
        %s162 = smul.u32 4, %s20
      $region16: #{hiaml_stem_forward.1} parent=11 // pred_fallthru
        _
      // Predicated region
      $region17: #{hiaml_stem_forward.1} parent=11 // pred_check
        %p163 = pneg %p69
      $region18: #{hiaml_stem_forward.1} parent=11 // pred_check_branch
        %165 = sbr.rel (%p163) target = $region20
      $region19: #{hiaml_stem_forward.1} parent=11 // pred_region
        _
      $region20: #{hiaml_stem_forward.1} parent=11 // pred_fallthru
        _
      // Predicated region
      $region21: #{hiaml_stem_forward.1} parent=11 // pred_check
        %p166 = pneg %p90
      $region22: #{hiaml_stem_forward.1} parent=11 // pred_check_branch
        %168 = sbr.rel (%p166) target = $region24
      $region23: #{hiaml_stem_forward.1} parent=11 // pred_region
        _
      $region24: #{hiaml_stem_forward.1} parent=11 // pred_fallthru
        _
      // Predicated region
      $region25: #{hiaml_stem_forward.1} parent=11 // pred_check
        %p169 = pneg %p111
      $region26: #{hiaml_stem_forward.1} parent=11 // pred_check_branch
        %171 = sbr.rel (%p169) target = $region28
      $region27: #{hiaml_stem_forward.1} parent=11 // pred_region
        _
      $region28: #{hiaml_stem_forward.1} parent=11 // pred_fallthru
        _
    $region12: #{hiaml_stem_forward.1} parent=5 // pred_fallthru
      _
    %p172 = scmp.lt.s32.totalorder %s10, 2
    // Predicated region
    $region29: #{hiaml_stem_forward.1} parent=5 // pred_check
      %p173 = pneg %p172
    $region30: #{hiaml_stem_forward.1} parent=5 // pred_check_branch
      %175 = sbr.rel (%p173) target = $region32
    $region31: #{hiaml_stem_forward.1} parent=5 // pred_region
      _
    $region32: #{hiaml_stem_forward.1} parent=5 // pred_fallthru
      _
    %p176 = scmp.le.s32.totalorder 1, %s10
    %p177 = scmp.lt.s32.totalorder %s10, 3
    %p178 = pnand %p176, %p177
    %p179 = pneg %p178
    // Predicated region
    $region33: #{hiaml_stem_forward.1} parent=5 // pred_check
      _
    $region34: #{hiaml_stem_forward.1} parent=5 // pred_check_branch
      %181 = sbr.rel (%p178) target = $region36
    $region35: #{hiaml_stem_forward.1} parent=5 // pred_region
      %s182 = ssub.s32 %s10, 1
      %s183 = smul.u32 4, %s20
      %p184 = scmp.lt.s32.totalorder %s183, 3
      %s185 = scalar_select %p184, %s183, 3
      %s186 = smul.addr %s185, 8
      %s187 = scalar_lea.vmem %s0, %s186
      %p188 = pneg %p48
      %p189 = pneg %p45
      %p190 = pneg %p69
      %p191 = pneg %p66
      %p192 = pneg %p90
      %p193 = pneg %p87
      %p194 = pneg %p111
      %p195 = pneg %p108
      %p196 = pneg %p139
      %p197 = pneg %p136
      %s198 = smul.u32 %s19, %s20
      %s199 = smul.u32 4, %s198
      %p200 = scmp.lt.s32.totalorder %s199, 3
      %s201 = scalar_select %p200, %s199, 3
      %s202 = smul.addr %s201, 2
      %s203 = smul.addr %s202, 8
      %s204 = scalar_lea.vmem %s4, %s203
      %s205 = smul.u32 4, %s20
      %p206 = scmp.lt.s32.totalorder %s205, 3
      %s207 = scalar_select %p206, %s205, 3
      %s208 = smul.addr %s207, 8
      %s209 = scalar_lea.vmem %s0, %s208
      %s210 = smul.u32 4, %s20
      %s211 = smul.u32 %s19, %s20
      %s212 = smul.u32 4, %s211
      %p213 = scmp.lt.s32.totalorder %s212, 3
      %s214 = scalar_select %p213, %s212, 3
      %s215 = smul.addr %s214, 2
      %s216 = smul.addr %s215, 8
      %s217 = scalar_lea.vmem %s4, %s216
      %s218 = smul.u32 %s19, %s20
      %s219 = smul.u32 4, %s218
      %v220 = vld [vmem:[%s209] sm:$0xff]
      %v221 = vld [vmem:[%s209 + $0x8] sm:$0xff]
      %v222 = vld [vmem:[%s209 + $0x10] sm:$0xff]
      %v223 = vld [vmem:[%s209 + $0x18] sm:$0xff]
      %v224 = vld [vmem:[%s1] sm:$0xff]
      %v225 = vld [vmem:[%s1 + $0x8] sm:$0xff]
      %v226 = vld [vmem:[%s1 + $0x10] sm:$0xff]
      %v227 = vld [vmem:[%s1 + $0x18] sm:$0xff]
      %v228 = vld [vmem:[%s1 + $0x20] sm:$0xff]
      %v229 = vld [vmem:[%s1 + $0x28] sm:$0xff]
      %v230 = vld [vmem:[%s1 + $0x30] sm:$0xff]
      %v231 = vld [vmem:[%s1 + $0x38] sm:$0xff]
      %v232 = vld [vmem:[%s1 + $0x40] sm:$0xff]
      %v233 = vld [vmem:[%s1 + $0x48] sm:$0xff]
      %v234 = vld [vmem:[%s1 + $0x50] sm:$0xff]
      %v235 = vld [vmem:[%s1 + $0x58] sm:$0xff]
      %v236 = vld [vmem:[%s1 + $0x60] sm:$0xff]
      %v237 = vld [vmem:[%s1 + $0x68] sm:$0xff]
      %v238 = vld [vmem:[%s1 + $0x70] sm:$0xff]
      %v239 = vld [vmem:[%s1 + $0x78] sm:$0xff]
      %v240 = vld [vmem:[%s1 + $0x80] sm:$0xff]
      %v241 = vld [vmem:[%s1 + $0x88] sm:$0xff]
      %v242 = vld [vmem:[%s1 + $0x90] sm:$0xff]
      %v243 = vld [vmem:[%s1 + $0x98] sm:$0xff]
      %v244 = vld [vmem:[%s1 + $0xa0] sm:$0xff]
      %v245 = vld [vmem:[%s1 + $0xa8] sm:$0xff]
      %v246 = vld [vmem:[%s1 + $0xb0] sm:$0xff]
      %v247 = vld [vmem:[%s1 + $0xb8] sm:$0xff]
      %v248 = vld [vmem:[%s1 + $0xc0] sm:$0xff]
      %v249 = vld [vmem:[%s1 + $0xc8] sm:$0xff]
      %v250 = vld [vmem:[%s1 + $0xd0] sm:$0xff]
      %v251 = vld [vmem:[%s1 + $0xd8] sm:$0xff]
      %v252 = vld [vmem:[%s1 + $0xe0] sm:$0xff]
      %v253 = vld [vmem:[%s1 + $0xe8] sm:$0xff]
      %v254 = vld [vmem:[%s1 + $0xf0] sm:$0xff]
      %v255 = vld [vmem:[%s1 + $0xf8] sm:$0xff]
      %256 = vmatprep.subr.mxu0 %v225
      %257 = vmatpush1.msra.mxu0 %v224
      %258 = vmatprep.subr.mxu0 %v227
      %259 = vmatpush1.msra.mxu0 %v226
      %260 = vmatprep.subr.mxu0 %v229
      %261 = vmatpush1.msra.mxu0 %v228
      %262 = vmatprep.subr.mxu0 %v231
      %263 = vmatpush1.msra.mxu0 %v230
      %264 = vmatprep.subr.mxu0 %v233
      %265 = vmatpush1.msra.mxu0 %v232
      %266 = vmatprep.subr.mxu0 %v235
      %267 = vmatpush1.msra.mxu0 %v234
      %268 = vmatprep.subr.mxu0 %v237
      %269 = vmatpush1.msra.mxu0 %v236
      %270 = vmatprep.subr.mxu0 %v239
      %271 = vmatpush1.msra.mxu0 %v238
      %272 = vmatprep.subr.mxu0 %v241
      %273 = vmatpush1.msra.mxu0 %v240
      %274 = vmatprep.subr.mxu0 %v243
      %275 = vmatpush1.msra.mxu0 %v242
      %276 = vmatprep.subr.mxu0 %v245
      %277 = vmatpush1.msra.mxu0 %v244
      %278 = vmatprep.subr.mxu0 %v247
      %279 = vmatpush1.msra.mxu0 %v246
      %280 = vmatprep.subr.mxu0 %v249
      %281 = vmatpush1.msra.mxu0 %v248
      %282 = vmatprep.subr.mxu0 %v251
      %283 = vmatpush1.msra.mxu0 %v250
      %284 = vmatprep.subr.mxu0 %v253
      %285 = vmatpush1.msra.mxu0 %v252
      %286 = vmatprep.subr.mxu0 %v255
      %287 = vmatpush1.msra.mxu0 %v254
      %288 = vmatprep.subr.mxu0 0.0
      %289 = vmatpush1.msra.mxu0 0.0
      %290 = vmatprep.subr.mxu0 0.0
      %291 = vmatpush1.msra.mxu0 0.0
      %292 = vmatprep.subr.mxu0 0.0
      %293 = vmatpush1.msra.mxu0 0.0
      %294 = vmatprep.subr.mxu0 0.0
      %295 = vmatpush1.msra.mxu0 0.0
      %296 = vmatprep.subr.mxu0 0.0
      %297 = vmatpush1.msra.mxu0 0.0
      %298 = vmatprep.subr.mxu0 0.0
      %299 = vmatpush1.msra.mxu0 0.0
      %300 = vmatprep.subr.mxu0 0.0
      %301 = vmatpush1.msra.mxu0 0.0
      %302 = vmatprep.subr.mxu0 0.0
      %303 = vmatpush1.msra.mxu0 0.0
      %304 = vmatprep.subr.mxu0 0.0
      %305 = vmatpush1.msra.mxu0 0.0
      %306 = vmatprep.subr.mxu0 0.0
      %307 = vmatpush1.msra.mxu0 0.0
      %308 = vmatprep.subr.mxu0 0.0
      %309 = vmatpush1.msra.mxu0 0.0
      %310 = vmatprep.subr.mxu0 0.0
      %311 = vmatpush1.msra.mxu0 0.0
      %312 = vmatprep.subr.mxu0 0.0
      %313 = vmatpush1.msra.mxu0 0.0
      %314 = vmatprep.subr.mxu0 0.0
      %315 = vmatpush1.msra.mxu0 0.0
      %316 = vmatprep.subr.mxu0 0.0
      %317 = vmatpush1.msra.mxu0 0.0
      %318 = vmatprep.subr.mxu0 0.0
      %319 = vmatpush1.msra.mxu0 0.0
      %320 = vmatprep.mubr.f32.mxu0 0.0
      %321 = vmatmul.mubr.f32.gmra.mrb[0].mxu0 %v220
      %v322 = vpop.f32.mrb[0].mxu0
      %v323 = vadd.f32 0.0, %v322
      %v324 = vpop.f32.mrb[0].mxu0
      %v325 = vadd.f32 0.0, %v324
      %326 = vmatprep.mubr.f32.mxu0 0.0
      %327 = vmatmul.mubr.f32.gmra.mrb[0].mxu0 %v221
      %v328 = vpop.f32.mrb[0].mxu0
      %v329 = vadd.f32 0.0, %v328
      %v330 = vpop.f32.mrb[0].mxu0
      %v331 = vadd.f32 0.0, %v330
      %332 = vmatprep.mubr.f32.mxu0 0.0
      %333 = vmatmul.mubr.f32.gmra.mrb[0].mxu0 %v222
      %v334 = vpop.f32.mrb[0].mxu0
      %v335 = vadd.f32 0.0, %v334
      %v336 = vpop.f32.mrb[0].mxu0
      %v337 = vadd.f32 0.0, %v336
      %338 = vmatprep.mubr.f32.mxu0 0.0
      %339 = vmatmul.mubr.f32.gmra.mrb[0].mxu0 %v223
      %v340 = vpop.f32.mrb[0].mxu0
      %v341 = vadd.f32 0.0, %v340
      %v342 = vpop.f32.mrb[0].mxu0
      %v343 = vadd.f32 0.0, %v342
      %344 = vdwg.mxu0
      %p345 = scmp.eq.s32.totalorder %s19, 0
      %p346 = scmp.eq.s32.totalorder %s20, 0
      %p347 = pnand %p345, %p346
      %p348 = pneg %p347
      // Predicated region
      $region37: #{hiaml_stem_forward.1} parent=35 // pred_check
        _
      $region38: #{hiaml_stem_forward.1} parent=35 // pred_check_branch
        %350 = sbr.rel (%p347) target = $region40
      $region39: #{hiaml_stem_forward.1} parent=35 // pred_region
        %v351 = vlaneseq
        %vm352 = vcmp.ge.s32.totalorder %v351, 0
        %vm353 = vcmp.lt.s32.totalorder %v351, 256
        %vm354 = vmand %vm352, %vm353
        %355 = vst.msk [vmem:[#allocation2] sm:$0x3] %vm354, 0.0
        %356 = vst.msk [vmem:[#allocation3] sm:$0x3] %vm354, 0.0
      $region40: #{hiaml_stem_forward.1} parent=35 // pred_fallthru
        _
      // Predicated region
      $region41: #{hiaml_stem_forward.1} parent=35 // pred_check
        %p357 = pneg %p345
      $region42: #{hiaml_stem_forward.1} parent=35 // pred_check_branch
        %359 = sbr.rel (%p357) target = $region44
      $region43: #{hiaml_stem_forward.1} parent=35 // pred_region
        %v360 = vld [vmem:[#allocation2] sm:$0x3]
        %v361 = vadd.f32 %v323, %v329
        %v362 = vadd.f32 %v361, %v335
        %v363 = vadd.f32 %v362, %v341
        %v364 = vrot.slane %v363, 4
        %v365 = vadd.f32 %v363, %v364
        %v366 = vrot.slane %v365, 2
        %v367 = vadd.f32 %v365, %v366
        %v368 = vrot.slane %v367, 1
        %v369 = vadd.f32 %v367, %v368
        %v370 = vadd.f32 %v325, %v331
        %v371 = vadd.f32 %v370, %v337
        %v372 = vadd.f32 %v371, %v343
        %v373 = vrot.slane %v372, 4
        %v374 = vadd.f32 %v372, %v373
        %v375 = vrot.slane %v374, 2
        %v376 = vadd.f32 %v374, %v375
        %v377 = vrot.slane %v376, 1
        %v378 = vadd.f32 %v376, %v377
        %v381 = vcombine.low %v369, %v378
        %v383 = vunpack.c.l.s4 1966171168
        %v384 = vunpack.c.0.s8 %v383
        %v385 = vlaneseq
        %v386 = vshrl.u32 %v385, 7
        %v387 = vsub.s32 %v384, %v386
        %v388 = vrot.slane %v381, %v387
        %v390 = vunpack.c.l.s4 1966171168
        %v391 = vunpack.c.0.s8 %v390
        %v392 = vlaneseq
        %v393 = vshrl.u32 %v392, 7
        %v394 = vsub.s32 %v391, %v393
        %v395 = vrot.slane %v388, %v394
        %v397 = vadd.f32 %v360, %v395
        %v398 = vlaneseq
        %vm399 = vcmp.ge.s32.totalorder %v398, 0
        %vm400 = vcmp.lt.s32.totalorder %v398, 256
        %vm401 = vmand %vm399, %vm400
        %402 = vst.msk [vmem:[#allocation2] sm:$0x3] %vm401, %v397
        %v403 = vld [vmem:[#allocation3] sm:$0x3]
        %v404 = vmul.f32 %v323, %v323
        %v405 = vmul.f32 %v325, %v325
        %v406 = vmul.f32 %v329, %v329
        %v407 = vmul.f32 %v331, %v331
        %v408 = vmul.f32 %v335, %v335
        %v409 = vmul.f32 %v337, %v337
        %v410 = vmul.f32 %v341, %v341
        %v411 = vmul.f32 %v343, %v343
        %v412 = vadd.f32 %v404, %v406
        %v413 = vadd.f32 %v412, %v408
        %v414 = vadd.f32 %v413, %v410
        %v415 = vrot.slane %v414, 4
        %v416 = vadd.f32 %v414, %v415
        %v417 = vrot.slane %v416, 2
        %v418 = vadd.f32 %v416, %v417
        %v419 = vrot.slane %v418, 1
        %v420 = vadd.f32 %v418, %v419
        %v421 = vadd.f32 %v405, %v407
        %v422 = vadd.f32 %v421, %v409
        %v423 = vadd.f32 %v422, %v411
        %v424 = vrot.slane %v423, 4
        %v425 = vadd.f32 %v423, %v424
        %v426 = vrot.slane %v425, 2
        %v427 = vadd.f32 %v425, %v426
        %v428 = vrot.slane %v427, 1
        %v429 = vadd.f32 %v427, %v428
        %v432 = vcombine.low %v420, %v429
        %v434 = vunpack.c.l.s4 1966171168
        %v435 = vunpack.c.0.s8 %v434
        %v436 = vlaneseq
        %v437 = vshrl.u32 %v436, 7
        %v438 = vsub.s32 %v435, %v437
        %v439 = vrot.slane %v432, %v438
        %v441 = vunpack.c.l.s4 1966171168
        %v442 = vunpack.c.0.s8 %v441
        %v443 = vlaneseq
        %v444 = vshrl.u32 %v443, 7
        %v445 = vsub.s32 %v442, %v444
        %v446 = vrot.slane %v439, %v445
        %v448 = vadd.f32 %v403, %v446
        %449 = vst.msk [vmem:[#allocation3] sm:$0x3] %vm401, %v448
      $region44: #{hiaml_stem_forward.1} parent=35 // pred_fallthru
        _
      %p450 = scmp.eq.s32.totalorder %s19, 1
      %p451 = pnand %p450, %p346
      %p452 = pneg %p451
      // Predicated region
      $region45: #{hiaml_stem_forward.1} parent=35 // pred_check
        _
      $region46: #{hiaml_stem_forward.1} parent=35 // pred_check_branch
        %454 = sbr.rel (%p451) target = $region48
      $region47: #{hiaml_stem_forward.1} parent=35 // pred_region
        %v455 = vld [vmem:[#allocation2] sm:$0x3]
        %v456 = vld [vmem:[#allocation3] sm:$0x3]
        %v458 = vlaneseq
        %v459 = vshrl.u32 %v458, 7
        %v460 = vsub.s32 0, %v459
        %v461 = vrot.slane %v455, %v460
        %v462 = vlaneseq
        %v463 = vshrl.u32 %v462, 7
        %v464 = vsub.s32 1, %v463
        %v465 = vrot.slane %v455, %v464
        %468 = vrot.lane.b32.xlu0 %v461, 64
        %v469 = vpop.permute.xlu0 %468
        %470 = vrot.lane.b32.xlu0 %v465, 64
        %v471 = vpop.permute.xlu0 %470
        %v472 = vlaneseq
        %v473 = vand.u32 %v472, 127
        %vm474 = vcmp.lt.s32.totalorder %v473, 64
        %v475 = vsel %vm474, %v469, %v471
        %v476 = vsel %vm474, %v471, %v469
        %v479 = vcombine.low %v476, %v475
        %v481 = vunpack.c.l.s4 1966171168
        %v482 = vunpack.c.0.s8 %v481
        %v483 = vlaneseq
        %v484 = vshrl.u32 %v483, 7
        %v485 = vsub.s32 %v482, %v484
        %v486 = vrot.slane %v479, %v485
        %v488 = vunpack.c.l.s4 1966171168
        %v489 = vunpack.c.0.s8 %v488
        %v490 = vlaneseq
        %v491 = vshrl.u32 %v490, 7
        %v492 = vsub.s32 %v489, %v491
        %v493 = vrot.slane %v486, %v492
        %v495 = vadd.f32 %v455, %v493
        %v497 = vlaneseq
        %v498 = vshrl.u32 %v497, 7
        %v499 = vsub.s32 0, %v498
        %v500 = vrot.slane %v456, %v499
        %v501 = vlaneseq
        %v502 = vshrl.u32 %v501, 7
        %v503 = vsub.s32 1, %v502
        %v504 = vrot.slane %v456, %v503
        %507 = vrot.lane.b32.xlu0 %v500, 64
        %v508 = vpop.permute.xlu0 %507
        %509 = vrot.lane.b32.xlu0 %v504, 64
        %v510 = vpop.permute.xlu0 %509
        %v511 = vsel %vm474, %v508, %v510
        %v512 = vsel %vm474, %v510, %v508
        %v515 = vcombine.low %v512, %v511
        %v517 = vunpack.c.l.s4 1966171168
        %v518 = vunpack.c.0.s8 %v517
        %v519 = vlaneseq
        %v520 = vshrl.u32 %v519, 7
        %v521 = vsub.s32 %v518, %v520
        %v522 = vrot.slane %v515, %v521
        %v524 = vunpack.c.l.s4 1966171168
        %v525 = vunpack.c.0.s8 %v524
        %v526 = vlaneseq
        %v527 = vshrl.u32 %v526, 7
        %v528 = vsub.s32 %v525, %v527
        %v529 = vrot.slane %v522, %v528
        %v531 = vadd.f32 %v456, %v529
        %v532 = vcombine.low %v465, %v461
        %v534 = vunpack.c.l.s4 1966171168
        %v535 = vunpack.c.0.s8 %v534
        %v536 = vlaneseq
        %v537 = vshrl.u32 %v536, 7
        %v538 = vsub.s32 %v535, %v537
        %v539 = vrot.slane %v532, %v538
        %v541 = vunpack.c.l.s4 1966171168
        %v542 = vunpack.c.0.s8 %v541
        %v543 = vlaneseq
        %v544 = vshrl.u32 %v543, 7
        %v545 = vsub.s32 %v542, %v544
        %v546 = vrot.slane %v539, %v545
        %v548 = vadd.f32 %v495, %v546
        %v549 = vcombine.low %v504, %v500
        %v551 = vunpack.c.l.s4 1966171168
        %v552 = vunpack.c.0.s8 %v551
        %v553 = vlaneseq
        %v554 = vshrl.u32 %v553, 7
        %v555 = vsub.s32 %v552, %v554
        %v556 = vrot.slane %v549, %v555
        %v558 = vunpack.c.l.s4 1966171168
        %v559 = vunpack.c.0.s8 %v558
        %v560 = vlaneseq
        %v561 = vshrl.u32 %v560, 7
        %v562 = vsub.s32 %v559, %v561
        %v563 = vrot.slane %v556, %v562
        %v565 = vadd.f32 %v531, %v563
        %v566 = vcombine.low %v475, %v476
        %v568 = vunpack.c.l.s4 1966171168
        %v569 = vunpack.c.0.s8 %v568
        %v570 = vlaneseq
        %v571 = vshrl.u32 %v570, 7
        %v572 = vsub.s32 %v569, %v571
        %v573 = vrot.slane %v566, %v572
        %v575 = vunpack.c.l.s4 1966171168
        %v576 = vunpack.c.0.s8 %v575
        %v577 = vlaneseq
        %v578 = vshrl.u32 %v577, 7
        %v579 = vsub.s32 %v576, %v578
        %v580 = vrot.slane %v573, %v579
        %v582 = vadd.f32 %v548, %v580
        %v583 = vcombine.low %v511, %v512
        %v585 = vunpack.c.l.s4 1966171168
        %v586 = vunpack.c.0.s8 %v585
        %v587 = vlaneseq
        %v588 = vshrl.u32 %v587, 7
        %v589 = vsub.s32 %v586, %v588
        %v590 = vrot.slane %v583, %v589
        %v592 = vunpack.c.l.s4 1966171168
        %v593 = vunpack.c.0.s8 %v592
        %v594 = vlaneseq
        %v595 = vshrl.u32 %v594, 7
        %v596 = vsub.s32 %v593, %v595
        %v597 = vrot.slane %v590, %v596
        %v599 = vadd.f32 %v565, %v597
        %v600 = vmul.f32 %v582, 0.0078125
        %v601 = vmul.f32 %v599, 0.0078125
        %v602 = vmul.f32 %v600, %v600
        %v603 = vsub.f32 %v601, %v602
        %v604 = vmax.f32 %v603, 0.0
        %v605 = vld [vmem:[%s2] sm:$0x3]
        %v606 = vadd.f32 %v604, 1e-05
        %v607 = vrsqrt.pop %v606
        %v608 = vmul.f32 %v605, %v607
        %v609 = vlaneseq
        %vm610 = vcmp.ge.s32.totalorder %v609, 0
        %vm611 = vcmp.lt.s32.totalorder %v609, 256
        %vm612 = vmand %vm610, %vm611
        %613 = vst.msk [vmem:[#allocation4] sm:$0x3] %vm612, %v608
        %v614 = vld [vmem:[%s3] sm:$0x3]
        %v615 = vmul.f32 %v600, %v608
        %v616 = vsub.f32 %v614, %v615
        %617 = vst.msk [vmem:[#allocation5] sm:$0x3] %vm612, %v616
      $region48: #{hiaml_stem_forward.1} parent=35 // pred_fallthru
        _
      // Predicated region
      $region49: #{hiaml_stem_forward.1} parent=35 // pred_check
        %p618 = pneg %p450
      $region50: #{hiaml_stem_forward.1} parent=35 // pred_check_branch
        %620 = sbr.rel (%p618) target = $region52
      $region51: #{hiaml_stem_forward.1} parent=35 // pred_region
        %v621 = vld [vmem:[#allocation4] sm:$0x3]
        %v623 = vlaneseq
        %v624 = vshrl.u32 %v623, 7
        %v625 = vsub.s32 0, %v624
        %v626 = vrot.slane %v621, %v625
        %v627 = vlaneseq
        %v628 = vshrl.u32 %v627, 7
        %v629 = vsub.s32 1, %v628
        %v630 = vrot.slane %v621, %v629
        %v633 = vmul.f32 %v323, %v626
        %v634 = vmul.f32 %v325, %v630
        %v635 = vmul.f32 %v329, %v626
        %v636 = vmul.f32 %v331, %v630
        %v637 = vmul.f32 %v335, %v626
        %v638 = vmul.f32 %v337, %v630
        %v639 = vmul.f32 %v341, %v626
        %v640 = vmul.f32 %v343, %v630
        %v641 = vld [vmem:[#allocation5] sm:$0x3]
        %v643 = vlaneseq
        %v644 = vshrl.u32 %v643, 7
        %v645 = vsub.s32 0, %v644
        %v646 = vrot.slane %v641, %v645
        %v647 = vlaneseq
        %v648 = vshrl.u32 %v647, 7
        %v649 = vsub.s32 1, %v648
        %v650 = vrot.slane %v641, %v649
        %v653 = vadd.f32 %v633, %v646
        %v654 = vadd.f32 %v634, %v650
        %v655 = vadd.f32 %v635, %v646
        %v656 = vadd.f32 %v636, %v650
        %v657 = vadd.f32 %v637, %v646
        %v658 = vadd.f32 %v638, %v650
        %v659 = vadd.f32 %v639, %v646
        %v660 = vadd.f32 %v640, %v650
        %v661 = vmax.f32 %v653, 0.0
        %v662 = vmax.f32 %v654, 0.0
        %v663 = vmax.f32 %v655, 0.0
        %v664 = vmax.f32 %v656, 0.0
        %v665 = vmax.f32 %v657, 0.0
        %v666 = vmax.f32 %v658, 0.0
        %v667 = vmax.f32 %v659, 0.0
        %v668 = vmax.f32 %v660, 0.0
        %669 = vst [vmem:[%s217] sm:$0xff] %v661
        %670 = vst [vmem:[%s217 + $0x8] sm:$0xff] %v662
        %671 = vst [vmem:[%s217 + $0x10] sm:$0xff] %v663
        %672 = vst [vmem:[%s217 + $0x18] sm:$0xff] %v664
        %673 = vst [vmem:[%s217 + $0x20] sm:$0xff] %v665
        %674 = vst [vmem:[%s217 + $0x28] sm:$0xff] %v666
        %675 = vst [vmem:[%s217 + $0x30] sm:$0xff] %v667
        %676 = vst [vmem:[%s217 + $0x38] sm:$0xff] %v668
      $region52: #{hiaml_stem_forward.1} parent=35 // pred_fallthru
        _
      %s677 = smul.u32 %s19, %s20
      %s678 = smul.u32 4, %s677
      %p679 = scmp.lt.s32.totalorder %s678, 3
      %s680 = scalar_select %p679, %s678, 3
      %s681 = smul.addr %s680, 2
      %s682 = smul.addr %s681, 8
      %s683 = scalar_lea.vmem %s4, %s682
      // Predicated region
      $region53: #{hiaml_stem_forward.1} parent=35 // pred_check
        %p684 = pneg %p136
      $region54: #{hiaml_stem_forward.1} parent=35 // pred_check_branch
        %686 = sbr.rel (%p684) target = $region56
      $region55: #{hiaml_stem_forward.1} parent=35 // pred_region
        %s687 = smul.u32 %s19, %s20
        %s688 = smul.u32 4, %s687
      $region56: #{hiaml_stem_forward.1} parent=35 // pred_fallthru
        _
    $region36: #{hiaml_stem_forward.1} parent=5 // pred_fallthru
      _
    %p689 = scmp.le.s32.totalorder 2, %s10
    // Predicated region
    $region57: #{hiaml_stem_forward.1} parent=5 // pred_check
      %p690 = pneg %p689
    $region58: #{hiaml_stem_forward.1} parent=5 // pred_check_branch
      %692 = sbr.rel (%p690) target = $region60
    $region59: #{hiaml_stem_forward.1} parent=5 // pred_region
      %s693 = ssub.s32 %s10, 2
      // Predicated region
      $region61: #{hiaml_stem_forward.1} parent=59 // pred_check
        %p694 = pneg %p142
      $region62: #{hiaml_stem_forward.1} parent=59 // pred_check_branch
        %696 = sbr.rel (%p694) target = $region64
      $region63: #{hiaml_stem_forward.1} parent=59 // pred_region
        %s697 = smul.u32 %s21, %s22
        %s698 = smul.u32 4, %s697
        %p699 = scmp.lt.s32.totalorder %s698, 3
        %s700 = scalar_select %p699, %s698, 3
        %s701 = smul.addr %s700, 2
        %s702 = smul.addr %s701, 8
        %s703 = scalar_lea.vmem %s4, %s702
      $region64: #{hiaml_stem_forward.1} parent=59 // pred_fallthru
        _
    $region60: #{hiaml_stem_forward.1} parent=5 // pred_fallthru
      _
  $region6: #{hiaml_stem_forward.1} parent=0 // loop_footer
    %s14 = sadd.s32 1, %s10
  $region7: #{hiaml_stem_forward.1} parent=0 // loop_footer_branch
    %9 = sbr.rel target = $region3
  $region8: #{hiaml_stem_forward.1} parent=0 // loop_exit
    _

</llo_original>
